<compile_context>
chip_gen: v5e
topology: v5e:2x2
jax: 0.10.0
libtpu: 0.0.40
codegen_flags: <defaults>
</compile_context>

<pallas_src>
import functools
import math

import jax
import jax.numpy as jnp
from jax.experimental import pallas as pl
from jax.experimental.pallas import tpu as pltpu


# Explicit VMEM ceiling handed to Mosaic.  48 MiB is below the 64 MiB physical VMEM of
# a v7x TensorCore (and well below v5e/v6e's 128 MiB); tile selection keeps the
# estimated per-step footprint under the smaller _VMEM_BUDGET_BYTES.
_VMEM_LIMIT_BYTES = 48 * 1024 * 1024
_VMEM_BUDGET_BYTES = 28 * 1024 * 1024


def _mlp_kernel(x_ref, w1_ref, b1_ref, w2_ref, b2_ref, w3_ref, b3_ref, o_ref):
    """One batch tile of (Linear -> Tanh) x 3.

    x_ref : (TILE_B, attrs_dim)  natural input layout/dtype (contiguous HBM tile)
    w*    : (out_f, in_f)        compute dtype (torch nn.Linear layout)
    b*    : (out_f, 1)           float32, broadcasts along the lane/batch dim
    o_ref : (out_dim, TILE_B)    float32, lane-dense store
    """
    cdt = w1_ref.dtype
    x = x_ref[...].astype(cdt)                             # (TB, A)

    # Layer 1: contract the minor dims of W1 (16, A) and x (TB, A) -> (16, TB).
    # Same MXU-native "A @ B^T" pattern as q @ k^T in flash attention: no wrapper-side
    # transpose of x, and the intermediate comes out lane-dense (batch on lanes).
    h = jax.lax.dot_general(
        w1_ref[...], x, (((1,), (1,)), ((), ())),
        preferred_element_type=jnp.float32)
    h = jnp.tanh(h + b1_ref[...])                          # (16, TB) f32

    # Layer 2: (8, 16) @ (16, TB) -> (8, TB)
    h = jnp.tanh(
        jnp.dot(w2_ref[...], h.astype(cdt), preferred_element_type=jnp.float32)
        + b2_ref[...])

    # Layer 3: (2, 8) @ (8, TB) -> (2, TB), lane-dense store
    o_ref[...] = jnp.tanh(
        jnp.dot(w3_ref[...], h.astype(cdt), preferred_element_type=jnp.float32)
        + b3_ref[...]).astype(o_ref.dtype)


def _round_up(n, m):
    return ((n + m - 1) // m) * m


def _pick_batch_tile(batch, attrs_dim, itemsize, tile_b):
    """Lane-aligned batch tile, capped by a VMEM budget and >= 2 grid steps."""
    # Per-row VMEM estimate: double-buffered x block, double-buffered (8-sublane
    # padded) f32 output block, plus f32 intermediates / recasts kept live in-kernel.
    bytes_per_row = (2 * attrs_dim * itemsize          # x blocks (double buffered)
                     + 2 * 8 * 4                       # out blocks (padded to 8 sublanes)
                     + (16 + 8 + 8) * 4                # h1 / h2 f32 temporaries
                     + 2 * 16 * itemsize)              # compute-dtype recasts
    vmem_cap = max(128, (_VMEM_BUDGET_BYTES // bytes_per_row) // 128 * 128)

    tb = max(128, (tile_b // 128) * 128)               # lane-aligned request
    tb = min(tb, vmem_cap)
    # Guarantee >= 2 grid steps whenever the batch allows it, so the "parallel"
    # grid axis can keep both TensorCores busy on v7x.
    tb = min(tb, _round_up(pl.cdiv(batch, 2), 128))
    if tb >= batch:
        tb = batch                                     # single full block (always legal)
    return tb


@functools.partial(jax.jit,
                   static_argnames=("tile_b", "compute_dtype", "transpose_output"))
def mlp_forward(x, params, *, tile_b=32768, compute_dtype=None,
                transpose_output=True):
    """Fused MLP forward.  params: list of (W, b) with W shaped (out, in) like torch.

    Returns (batch, out_dim) by default (torch layout).  transpose_output=False returns
    the kernel-native lane-dense (out_dim, batch) layout and skips the final transpose.
    """
    (w1, b1), (w2, b2), (w3, b3) = params
    batch, attrs_dim = x.shape
    out_dim = w3.shape[0]

    cdt = jnp.dtype(compute_dtype) if compute_dtype is not None else x.dtype
    tb = _pick_batch_tile(batch, attrs_dim, x.dtype.itemsize, tile_b)
    grid = (pl.cdiv(batch, tb),)

    # Only the tiny weights/biases get touched wrapper-side; x goes straight into the
    # kernel in its natural layout & dtype (no extra HBM pass over the batch).
    w1c, w2c, w3c = (w.astype(cdt) for w in (w1, w2, w3))
    b1c, b2c, b3c = (b.astype(jnp.float32)[:, None] for b in (b1, b2, b3))

    const = lambda i: (0, 0)                           # params resident in VMEM
    cost = pl.CostEstimate(
        flops=2 * batch * (attrs_dim * 16 + 16 * 8 + 8 * 2),
        transcendentals=batch * (16 + 8 + 2),
        bytes_accessed=(batch * attrs_dim * x.dtype.itemsize
                        + batch * out_dim * 4
                        + sum(int(a.size) * a.dtype.itemsize
                              for a in (w1c, b1c, w2c, b2c, w3c, b3c))),
    )

    out_t = pl.pallas_call(
        _mlp_kernel,
        out_shape=jax.ShapeDtypeStruct((out_dim, batch), jnp.float32),
        grid=grid,
        in_specs=[
            pl.BlockSpec((tb, attrs_dim), lambda i: (i, 0)),   # contiguous HBM tile
            pl.BlockSpec(w1c.shape, const),
            pl.BlockSpec(b1c.shape, const),
            pl.BlockSpec(w2c.shape, const),
            pl.BlockSpec(b2c.shape, const),
            pl.BlockSpec(w3c.shape, const),
            pl.BlockSpec(b3c.shape, const),
        ],
        out_specs=pl.BlockSpec((out_dim, tb), lambda i: (0, i)),  # lane-dense store
        compiler_params=pltpu.CompilerParams(
            dimension_semantics=("parallel",),
            vmem_limit_bytes=_VMEM_LIMIT_BYTES),
        cost_estimate=cost,
    )(x, w1c, b1c, w2c, b2c, w3c, b3c)

    return out_t.T if transpose_output else out_t      # (batch, out_dim) torch layout


def init_linear_params(key, in_features, out_features):
    """Deterministic init mimicking torch.nn.Linear defaults (uniform +-1/sqrt(in))."""
    kw, kb = jax.random.split(key)
    bound = 1.0 / math.sqrt(in_features)
    w = jax.random.uniform(kw, (out_features, in_features), jnp.float32,
                           minval=-bound, maxval=bound)
    b = jax.random.uniform(kb, (out_features,), jnp.float32,
                           minval=-bound, maxval=bound)
    return w, b


def init_mlp_params(key, attrs_dim, dim_list=(16, 8, 2)):
    dims = [attrs_dim] + list(dim_list)
    keys = jax.random.split(key, len(dim_list))
    return [init_linear_params(keys[i], dims[i], dims[i + 1])
            for i in range(len(dim_list))]


def mlp_reference(x, params):
    """Pure-JAX reference (high-precision matmuls) for correctness checks."""
    h = x
    for w, b in params:
        h = jnp.tanh(jnp.dot(h, w.T, precision=jax.lax.Precision.HIGHEST) + b)
    return h


if __name__ == "__main__":
    key = jax.random.PRNGKey(0)
    k_x, k_p = jax.random.split(key)

    batch, attrs_dim = 1024, 32
    x = jax.random.normal(k_x, (batch, attrs_dim), dtype=jnp.float32)
    params = init_mlp_params(k_p, attrs_dim, dim_list=(16, 8, 2))

    ref = mlp_reference(x, params)

    # f32 path (default): batch split into >= 2 lane-aligned tiles (grid of 2 here).
    out = jax.block_until_ready(mlp_forward(x, params))
    assert out.shape == (batch, 2), out.shape
    assert jnp.allclose(out, ref, atol=1e-3, rtol=0), "f32 kernel mismatch vs reference"

    # bf16 compute path (weights cast to bf16, x cast in-kernel).
    out_bf16 = jax.block_until_ready(mlp_forward(x, params, compute_dtype=jnp.bfloat16))
    assert jnp.allclose(out_bf16, ref, atol=5e-2, rtol=0), "bf16 kernel mismatch"

    # Ragged batch: exercises the masked partial tail tile.
    out_ragged = jax.block_until_ready(mlp_forward(x[:1000], params))
    assert out_ragged.shape == (1000, 2)
    assert jnp.allclose(out_ragged, ref[:1000], atol=1e-3, rtol=0), "ragged-batch mismatch"

    # Tiny batch: single full block, grid of 1.
    out_small = jax.block_until_ready(mlp_forward(x[:8], params))
    assert out_small.shape == (8, 2)
    assert jnp.allclose(out_small, ref[:8], atol=1e-3, rtol=0), "small-batch mismatch"

    print("KERNEL_OK")
</pallas_src>

<mosaic_0001>
module attributes {stable_mosaic.version = 11 : i64} {
  func.func @_mlp_kernel(%arg0: i32, %arg1: memref<512x32xf32, #tpu.memory_space<vmem>>, %arg2: memref<16x32xf32, #tpu.memory_space<vmem>>, %arg3: memref<16x1xf32, #tpu.memory_space<vmem>>, %arg4: memref<8x16xf32, #tpu.memory_space<vmem>>, %arg5: memref<8x1xf32, #tpu.memory_space<vmem>>, %arg6: memref<2x8xf32, #tpu.memory_space<vmem>>, %arg7: memref<2x1xf32, #tpu.memory_space<vmem>>, %arg8: memref<2x512xf32, #tpu.memory_space<vmem>>) attributes {dimension_semantics = [#tpu.dimension_semantics<parallel>], iteration_bounds = array<i64: 2>, scalar_prefetch = 0 : i64, scratch_operands = 0 : i64, tpu.core_type = #tpu.core_type<tc>, window_params = [{transform_indices = @transform_0, window_bounds = array<i64: 512, 32>}, {pipeline_mode = #tpu.pipeline_mode<synchronous>, transform_indices = @transform_1, window_bounds = array<i64: 16, 32>}, {pipeline_mode = #tpu.pipeline_mode<synchronous>, transform_indices = @transform_2, window_bounds = array<i64: 16, 1>}, {pipeline_mode = #tpu.pipeline_mode<synchronous>, transform_indices = @transform_3, window_bounds = array<i64: 8, 16>}, {pipeline_mode = #tpu.pipeline_mode<synchronous>, transform_indices = @transform_4, window_bounds = array<i64: 8, 1>}, {pipeline_mode = #tpu.pipeline_mode<synchronous>, transform_indices = @transform_5, window_bounds = array<i64: 2, 8>}, {pipeline_mode = #tpu.pipeline_mode<synchronous>, transform_indices = @transform_6, window_bounds = array<i64: 2, 1>}, {transform_indices = @transform_7, window_bounds = array<i64: 2, 512>}]} {
    %c0 = arith.constant 0 : index
    %c0_0 = arith.constant 0 : index
    %0 = vector.load %arg1[%c0, %c0_0] : memref<512x32xf32, #tpu.memory_space<vmem>>, vector<512x32xf32>
    %c0_1 = arith.constant 0 : index
    %c0_2 = arith.constant 0 : index
    %1 = vector.load %arg2[%c0_1, %c0_2] : memref<16x32xf32, #tpu.memory_space<vmem>>, vector<16x32xf32>
    %cst = arith.constant dense<0.000000e+00> : vector<16x512xf32>
    %2 = tpu.matmul %1, %0, %cst {dimension_numbers = #tpu.dot_dimension_numbers<[1], [1], [0], [0], [0, 0, 1, 0], [], []>} : vector<16x32xf32>, vector<512x32xf32>, vector<16x512xf32> -> vector<16x512xf32>
    %c0_3 = arith.constant 0 : index
    %c0_4 = arith.constant 0 : index
    %3 = vector.load %arg3[%c0_3, %c0_4] : memref<16x1xf32, #tpu.memory_space<vmem>>, vector<16x1xf32>
    %4 = vector.broadcast %3 : vector<16x1xf32> to vector<16x512xf32>
    %5 = arith.addf %2, %4 : vector<16x512xf32>
    %6 = math.tanh %5 : vector<16x512xf32>
    %c0_5 = arith.constant 0 : index
    %c0_6 = arith.constant 0 : index
    %7 = vector.load %arg4[%c0_5, %c0_6] : memref<8x16xf32, #tpu.memory_space<vmem>>, vector<8x16xf32>
    %cst_7 = arith.constant dense<0.000000e+00> : vector<8x512xf32>
    %8 = tpu.matmul %7, %6, %cst_7 {dimension_numbers = #tpu.dot_dimension_numbers<[1], [0], [0], [1], [0, 0, 1, 1], [], []>} : vector<8x16xf32>, vector<16x512xf32>, vector<8x512xf32> -> vector<8x512xf32>
    %c0_8 = arith.constant 0 : index
    %c0_9 = arith.constant 0 : index
    %9 = vector.load %arg5[%c0_8, %c0_9] : memref<8x1xf32, #tpu.memory_space<vmem>>, vector<8x1xf32>
    %10 = vector.broadcast %9 : vector<8x1xf32> to vector<8x512xf32>
    %11 = arith.addf %8, %10 : vector<8x512xf32>
    %12 = math.tanh %11 : vector<8x512xf32>
    %c0_10 = arith.constant 0 : index
    %c0_11 = arith.constant 0 : index
    %13 = vector.load %arg6[%c0_10, %c0_11] : memref<2x8xf32, #tpu.memory_space<vmem>>, vector<2x8xf32>
    %cst_12 = arith.constant dense<0.000000e+00> : vector<2x512xf32>
    %14 = tpu.matmul %13, %12, %cst_12 {dimension_numbers = #tpu.dot_dimension_numbers<[1], [0], [0], [1], [0, 0, 1, 1], [], []>} : vector<2x8xf32>, vector<8x512xf32>, vector<2x512xf32> -> vector<2x512xf32>
    %c0_13 = arith.constant 0 : index
    %c0_14 = arith.constant 0 : index
    %15 = vector.load %arg7[%c0_13, %c0_14] : memref<2x1xf32, #tpu.memory_space<vmem>>, vector<2x1xf32>
    %16 = vector.broadcast %15 : vector<2x1xf32> to vector<2x512xf32>
    %17 = arith.addf %14, %16 : vector<2x512xf32>
    %18 = math.tanh %17 : vector<2x512xf32>
    %c0_15 = arith.constant 0 : index
    %c0_16 = arith.constant 0 : index
    %19 = vector.load %arg8[%c0_15, %c0_16] : memref<2x512xf32, #tpu.memory_space<vmem>>, vector<2x512xf32>
    tpu.vector_store %arg8[%c0_15, %c0_16], %18 {strides = array<i32>} : memref<2x512xf32, #tpu.memory_space<vmem>>, vector<2x512xf32>,
    return
  }
  func.func @transform_0(%arg0: i32) -> (i32, i32) {
    %c0_i32 = arith.constant 0 : i32
    %c0_i32_0 = arith.constant 0 : i32
    return %arg0, %c0_i32 : i32, i32
  }
  func.func @transform_1(%arg0: i32) -> (i32, i32) {
    %c0_i32 = arith.constant 0 : i32
    %c0_i32_0 = arith.constant 0 : i32
    %c0_i32_1 = arith.constant 0 : i32
    return %c0_i32, %c0_i32_0 : i32, i32
  }
  func.func @transform_2(%arg0: i32) -> (i32, i32) {
    %c0_i32 = arith.constant 0 : i32
    %c0_i32_0 = arith.constant 0 : i32
    %c0_i32_1 = arith.constant 0 : i32
    return %c0_i32, %c0_i32_0 : i32, i32
  }
  func.func @transform_3(%arg0: i32) -> (i32, i32) {
    %c0_i32 = arith.constant 0 : i32
    %c0_i32_0 = arith.constant 0 : i32
    %c0_i32_1 = arith.constant 0 : i32
    return %c0_i32, %c0_i32_0 : i32, i32
  }
  func.func @transform_4(%arg0: i32) -> (i32, i32) {
    %c0_i32 = arith.constant 0 : i32
    %c0_i32_0 = arith.constant 0 : i32
    %c0_i32_1 = arith.constant 0 : i32
    return %c0_i32, %c0_i32_0 : i32, i32
  }
  func.func @transform_5(%arg0: i32) -> (i32, i32) {
    %c0_i32 = arith.constant 0 : i32
    %c0_i32_0 = arith.constant 0 : i32
    %c0_i32_1 = arith.constant 0 : i32
    return %c0_i32, %c0_i32_0 : i32, i32
  }
  func.func @transform_6(%arg0: i32) -> (i32, i32) {
    %c0_i32 = arith.constant 0 : i32
    %c0_i32_0 = arith.constant 0 : i32
    %c0_i32_1 = arith.constant 0 : i32
    return %c0_i32, %c0_i32_0 : i32, i32
  }
  func.func @transform_7(%arg0: i32) -> (i32, i32) {
    %c0_i32 = arith.constant 0 : i32
    %c0_i32_0 = arith.constant 0 : i32
    return %c0_i32, %arg0 : i32, i32
  }
}

</mosaic_0001>

<llo_original>
// kernel: mlp_forward.1
$region0: #{mlp_forward.1}
  #allocation0 [shape = 'u32[]', space=smem, size = 0x4, offset = 0x4, fixed_abs, tag = 'smem constant byte address 0x4 - core index']
  #allocation1 [shape = 'u32[72,128]{1,0:T(1,128)}', space=vmem, size = 0x9000, scoped, tag = 'internal scratch']
  %s0 = inlined_call_operand.vmem [shape: f32[1024,32], index: 0, kind: input, shape index: {}]
  %s1 = inlined_call_operand.vmem [shape: f32[16,32], index: 1, kind: input, shape index: {}]
  %s2 = inlined_call_operand.vmem [shape: f32[16,1], index: 2, kind: input, shape index: {}]
  %s3 = inlined_call_operand.vmem [shape: f32[8,16], index: 3, kind: input, shape index: {}]
  %s4 = inlined_call_operand.vmem [shape: f32[8,1], index: 4, kind: input, shape index: {}]
  %s5 = inlined_call_operand.vmem [shape: f32[2,8], index: 5, kind: input, shape index: {}]
  %s6 = inlined_call_operand.vmem [shape: f32[2,1], index: 6, kind: input, shape index: {}]
  %s7 = inlined_call_operand.hbm [shape: f32[2,1024], index: 7, kind: output, shape index: {}]
  %s8 = sld [smem:[#allocation0]]
  $region61: #{mlp_forward.1} parent=0
    _
  %s10 = ssub.s32 1, %s8
  %s11 = scalar_select 0, %s10, %s8
  $region1: #{mlp_forward.1} parent=0
    #allocation2 [shape = 'u8[8192]{0}', space=vmem, size = 0x2000, scoped, tag = 'output window, operand 0']
    #allocation3 [shape = 's32[2]{0}', space=sflag, size = 0x8, scoped, tag = 'scoped memory for mlp_forward.1']
    %12 = vsyncpa [#allocation3], 0
    %s13 = scalar_lea.sflag [#allocation3], 1
    %14 = vsyncpa %s13, 0
    loop: start=0, step=1, limit=4
    $region2: #{mlp_forward.1} parent=1 // loop_pre_header
      _
    $region3: #{mlp_forward.1} parent=1 // loop_header
      %s16 = sphi 0, %s20
      %p17 = scmp.ge.s32.totalorder %s16, 4
      %s26 = sphi 0, %s28
      %s29 = sphi 0, %s26
      %s30 = sphi 0, %s29
      %s46 = sphi 0, %s30
      %s50 = sphi 0, %s50
      %s52 = sphi 0, %s50
      %s53 = sphi 0, %s52
      %s67 = sphi 0, %s53
      %s71 = sphi 0, %s71
      %s73 = sphi 0, %s71
      %s74 = sphi 0, %s73
      %s88 = sphi 0, %s74
      %s92 = sphi 0, %s92
      %s94 = sphi 0, %s92
      %s95 = sphi 0, %s94
      %s109 = sphi 0, %s95
      %s113 = sphi 0, %s113
      %s115 = sphi 0, %s113
      %s116 = sphi 0, %s115
      %s130 = sphi 0, %s116
      %s134 = sphi 0, %s134
      %s136 = sphi 0, %s134
      %s137 = sphi 0, %s136
      %s151 = sphi 0, %s137
      %s155 = sphi 0, %s155
      %s157 = sphi 0, %s155
      %s158 = sphi 0, %s157
      %s172 = sphi 0, %s158
      %s178 = sphi 0, %s180
      %s181 = sphi 0, %s178
      %s182 = sphi 0, %s181
      %s198 = sphi 0, %s182
    $region4: #{mlp_forward.1} parent=1 // loop_header_branch
      %19 = sbr.rel (%p17) target = $region8
    $region5: #{mlp_forward.1} parent=1 // loop_body
      %s21 = ssub.s32 %s16, 1
      %s22 = ssub.s32 %s16, 2
      %s23 = sadd.s32 %s16, 1
      %s24 = ssub.s32 %s16, %s23
      %p25 = scmp.eq.s32.totalorder %s24, 0
      %s27 = sadd.s32 %s26, 1
      %s28 = scalar_select %p25, %s26, %s27
      %p31 = pneg %p25
      %p32 = scmp.eq.s32.totalorder %s16, 1
      %p33 = por %p31, %p32
      %p34 = scmp.ne.s32.totalorder %s26, %s29
      %p35 = scmp.eq.s32.totalorder %s16, 0
      %p36 = por %p34, %p35
      %p37 = scmp.ne.s32.totalorder %s26, %s29
      %p38 = scmp.eq.s32.totalorder %s21, 1
      %p39 = por %p37, %p38
      %p40 = scmp.ne.s32.totalorder %s29, %s30
      %p41 = scmp.eq.s32.totalorder %s21, 0
      %p42 = por %p40, %p41
      %p43 = scmp.ne.s32.totalorder %s29, %s30
      %p44 = scmp.eq.s32.totalorder %s22, 1
      %p45 = por %p43, %p44
      %p47 = scmp.ne.s32.totalorder %s30, %s46
      %p48 = scmp.eq.s32.totalorder %s22, 0
      %p49 = por %p47, %p48
      %s51 = sadd.s32 %s50, 1
      %p54 = scmp.eq.s32.totalorder %s16, 1
      %p55 = scmp.ne.s32.totalorder %s50, %s52
      %p56 = scmp.eq.s32.totalorder %s16, 0
      %p57 = por %p55, %p56
      %p58 = scmp.ne.s32.totalorder %s50, %s52
      %p59 = scmp.eq.s32.totalorder %s21, 1
      %p60 = por %p58, %p59
      %p61 = scmp.ne.s32.totalorder %s52, %s53
      %p62 = scmp.eq.s32.totalorder %s21, 0
      %p63 = por %p61, %p62
      %p64 = scmp.ne.s32.totalorder %s52, %s53
      %p65 = scmp.eq.s32.totalorder %s22, 1
      %p66 = por %p64, %p65
      %p68 = scmp.ne.s32.totalorder %s53, %s67
      %p69 = scmp.eq.s32.totalorder %s22, 0
      %p70 = por %p68, %p69
      %s72 = sadd.s32 %s71, 1
      %p75 = scmp.eq.s32.totalorder %s16, 1
      %p76 = scmp.ne.s32.totalorder %s71, %s73
      %p77 = scmp.eq.s32.totalorder %s16, 0
      %p78 = por %p76, %p77
      %p79 = scmp.ne.s32.totalorder %s71, %s73
      %p80 = scmp.eq.s32.totalorder %s21, 1
      %p81 = por %p79, %p80
      %p82 = scmp.ne.s32.totalorder %s73, %s74
      %p83 = scmp.eq.s32.totalorder %s21, 0
      %p84 = por %p82, %p83
      %p85 = scmp.ne.s32.totalorder %s73, %s74
      %p86 = scmp.eq.s32.totalorder %s22, 1
      %p87 = por %p85, %p86
      %p89 = scmp.ne.s32.totalorder %s74, %s88
      %p90 = scmp.eq.s32.totalorder %s22, 0
      %p91 = por %p89, %p90
      %s93 = sadd.s32 %s92, 1
      %p96 = scmp.eq.s32.totalorder %s16, 1
      %p97 = scmp.ne.s32.totalorder %s92, %s94
      %p98 = scmp.eq.s32.totalorder %s16, 0
      %p99 = por %p97, %p98
      %p100 = scmp.ne.s32.totalorder %s92, %s94
      %p101 = scmp.eq.s32.totalorder %s21, 1
      %p102 = por %p100, %p101
      %p103 = scmp.ne.s32.totalorder %s94, %s95
      %p104 = scmp.eq.s32.totalorder %s21, 0
      %p105 = por %p103, %p104
      %p106 = scmp.ne.s32.totalorder %s94, %s95
      %p107 = scmp.eq.s32.totalorder %s22, 1
      %p108 = por %p106, %p107
      %p110 = scmp.ne.s32.totalorder %s95, %s109
      %p111 = scmp.eq.s32.totalorder %s22, 0
      %p112 = por %p110, %p111
      %s114 = sadd.s32 %s113, 1
      %p117 = scmp.eq.s32.totalorder %s16, 1
      %p118 = scmp.ne.s32.totalorder %s113, %s115
      %p119 = scmp.eq.s32.totalorder %s16, 0
      %p120 = por %p118, %p119
      %p121 = scmp.ne.s32.totalorder %s113, %s115
      %p122 = scmp.eq.s32.totalorder %s21, 1
      %p123 = por %p121, %p122
      %p124 = scmp.ne.s32.totalorder %s115, %s116
      %p125 = scmp.eq.s32.totalorder %s21, 0
      %p126 = por %p124, %p125
      %p127 = scmp.ne.s32.totalorder %s115, %s116
      %p128 = scmp.eq.s32.totalorder %s22, 1
      %p129 = por %p127, %p128
      %p131 = scmp.ne.s32.totalorder %s116, %s130
      %p132 = scmp.eq.s32.totalorder %s22, 0
      %p133 = por %p131, %p132
      %s135 = sadd.s32 %s134, 1
      %p138 = scmp.eq.s32.totalorder %s16, 1
      %p139 = scmp.ne.s32.totalorder %s134, %s136
      %p140 = scmp.eq.s32.totalorder %s16, 0
      %p141 = por %p139, %p140
      %p142 = scmp.ne.s32.totalorder %s134, %s136
      %p143 = scmp.eq.s32.totalorder %s21, 1
      %p144 = por %p142, %p143
      %p145 = scmp.ne.s32.totalorder %s136, %s137
      %p146 = scmp.eq.s32.totalorder %s21, 0
      %p147 = por %p145, %p146
      %p148 = scmp.ne.s32.totalorder %s136, %s137
      %p149 = scmp.eq.s32.totalorder %s22, 1
      %p150 = por %p148, %p149
      %p152 = scmp.ne.s32.totalorder %s137, %s151
      %p153 = scmp.eq.s32.totalorder %s22, 0
      %p154 = por %p152, %p153
      %s156 = sadd.s32 %s155, 1
      %p159 = scmp.eq.s32.totalorder %s16, 1
      %p160 = scmp.ne.s32.totalorder %s155, %s157
      %p161 = scmp.eq.s32.totalorder %s16, 0
      %p162 = por %p160, %p161
      %p163 = scmp.ne.s32.totalorder %s155, %s157
      %p164 = scmp.eq.s32.totalorder %s21, 1
      %p165 = por %p163, %p164
      %p166 = scmp.ne.s32.totalorder %s157, %s158
      %p167 = scmp.eq.s32.totalorder %s21, 0
      %p168 = por %p166, %p167
      %p169 = scmp.ne.s32.totalorder %s157, %s158
      %p170 = scmp.eq.s32.totalorder %s22, 1
      %p171 = por %p169, %p170
      %p173 = scmp.ne.s32.totalorder %s158, %s172
      %p174 = scmp.eq.s32.totalorder %s22, 0
      %p175 = por %p173, %p174
      %s176 = ssub.s32 %s16, %s23
      %p177 = scmp.eq.s32.totalorder %s176, 0
      %s179 = sadd.s32 %s178, 1
      %s180 = scalar_select %p177, %s178, %s179
      %p183 = pneg %p177
      %p184 = scmp.eq.s32.totalorder %s16, 1
      %p185 = por %p183, %p184
      %p186 = scmp.ne.s32.totalorder %s178, %s181
      %p187 = scmp.eq.s32.totalorder %s16, 0
      %p188 = por %p186, %p187
      %p189 = scmp.ne.s32.totalorder %s178, %s181
      %p190 = scmp.eq.s32.totalorder %s21, 1
      %p191 = por %p189, %p190
      %p192 = scmp.ne.s32.totalorder %s181, %s182
      %p193 = scmp.eq.s32.totalorder %s21, 0
      %p194 = por %p192, %p193
      %p195 = scmp.ne.s32.totalorder %s181, %s182
      %p196 = scmp.eq.s32.totalorder %s22, 1
      %p197 = por %p195, %p196
      %p199 = scmp.ne.s32.totalorder %s182, %s198
      %p200 = scmp.eq.s32.totalorder %s22, 0
      %p201 = por %p199, %p200
      %p202 = scmp.le.s32.totalorder 1, %s16
      %p203 = scmp.lt.s32.totalorder %s16, 3
      %p204 = pnand %p202, %p203
      %p205 = pneg %p204
      // Predicated region
      $region9: #{mlp_forward.1} parent=5 // pred_check
        _
      $region10: #{mlp_forward.1} parent=5 // pred_check_branch
        %207 = sbr.rel (%p204) target = $region12
      $region11: #{mlp_forward.1} parent=5 // pred_region
        %s208 = ssub.s32 %s16, 1
        // Predicated region
        $region13: #{mlp_forward.1} parent=11 // pred_check
          %p209 = pneg %p63
        $region14: #{mlp_forward.1} parent=11 // pred_check_branch
          %211 = sbr.rel (%p209) target = $region16
        $region15: #{mlp_forward.1} parent=11 // pred_region
          _
        $region16: #{mlp_forward.1} parent=11 // pred_fallthru
          _
        // Predicated region
        $region17: #{mlp_forward.1} parent=11 // pred_check
          %p212 = pneg %p84
        $region18: #{mlp_forward.1} parent=11 // pred_check_branch
          %214 = sbr.rel (%p212) target = $region20
        $region19: #{mlp_forward.1} parent=11 // pred_region
          _
        $region20: #{mlp_forward.1} parent=11 // pred_fallthru
          _
        // Predicated region
        $region21: #{mlp_forward.1} parent=11 // pred_check
          %p215 = pneg %p105
        $region22: #{mlp_forward.1} parent=11 // pred_check_branch
          %217 = sbr.rel (%p215) target = $region24
        $region23: #{mlp_forward.1} parent=11 // pred_region
          _
        $region24: #{mlp_forward.1} parent=11 // pred_fallthru
          _
        // Predicated region
        $region25: #{mlp_forward.1} parent=11 // pred_check
          %p218 = pneg %p126
        $region26: #{mlp_forward.1} parent=11 // pred_check_branch
          %220 = sbr.rel (%p218) target = $region28
        $region27: #{mlp_forward.1} parent=11 // pred_region
          _
        $region28: #{mlp_forward.1} parent=11 // pred_fallthru
          _
        // Predicated region
        $region29: #{mlp_forward.1} parent=11 // pred_check
          %p221 = pneg %p147
        $region30: #{mlp_forward.1} parent=11 // pred_check_branch
          %223 = sbr.rel (%p221) target = $region32
        $region31: #{mlp_forward.1} parent=11 // pred_region
          _
        $region32: #{mlp_forward.1} parent=11 // pred_fallthru
          _
        // Predicated region
        $region33: #{mlp_forward.1} parent=11 // pred_check
          %p224 = pneg %p168
        $region34: #{mlp_forward.1} parent=11 // pred_check_branch
          %226 = sbr.rel (%p224) target = $region36
        $region35: #{mlp_forward.1} parent=11 // pred_region
          _
        $region36: #{mlp_forward.1} parent=11 // pred_fallthru
          _
      $region12: #{mlp_forward.1} parent=5 // pred_fallthru
        _
      %p227 = scmp.lt.s32.totalorder %s16, 2
      // Predicated region
      $region37: #{mlp_forward.1} parent=5 // pred_check
        %p228 = pneg %p227
      $region38: #{mlp_forward.1} parent=5 // pred_check_branch
        %230 = sbr.rel (%p228) target = $region40
      $region39: #{mlp_forward.1} parent=5 // pred_region
        // Predicated region
        $region41: #{mlp_forward.1} parent=39 // pred_check
          %p231 = pneg %p36
        $region42: #{mlp_forward.1} parent=39 // pred_check_branch
          %233 = sbr.rel (%p231) target = $region44
        $region43: #{mlp_forward.1} parent=39 // pred_region
          %s234 = smul.u32 64, %s16
          %p235 = scmp.lt.s32.totalorder %s234, 127
          %s236 = scalar_select %p235, %s234, 127
          %s237 = smul.addr %s236, 8
          %s238 = scalar_lea.vmem %s0, %s237
          %s239 = smul.u32 64, %s16
        $region44: #{mlp_forward.1} parent=39 // pred_fallthru
          _
      $region40: #{mlp_forward.1} parent=5 // pred_fallthru
        _
      %p240 = scmp.le.s32.totalorder 1, %s16
      %p241 = scmp.lt.s32.totalorder %s16, 3
      %p242 = pnand %p240, %p241
      %p243 = pneg %p242
      // Predicated region
      $region45: #{mlp_forward.1} parent=5 // pred_check
        _
      $region46: #{mlp_forward.1} parent=5 // pred_check_branch
        %245 = sbr.rel (%p242) target = $region48
      $region47: #{mlp_forward.1} parent=5 // pred_region
        %s246 = ssub.s32 %s16, 1
        %s247 = smul.u32 64, %s21
        %p248 = scmp.lt.s32.totalorder %s247, 127
        %s249 = scalar_select %p248, %s247, 127
        %s250 = smul.addr %s249, 8
        %s251 = scalar_lea.vmem %s0, %s250
        %p252 = pneg %p42
        %p253 = pneg %p39
        %p254 = pneg %p63
        %p255 = pneg %p60
        %p256 = pneg %p84
        %p257 = pneg %p81
        %p258 = pneg %p105
        %p259 = pneg %p102
        %p260 = pneg %p126
        %p261 = pneg %p123
        %p262 = pneg %p147
        %p263 = pneg %p144
        %p264 = pneg %p168
        %p265 = pneg %p165
        %p266 = pneg %p194
        %p267 = pneg %p191
        %s268 = sand.u32 %s181, 1
        %s269 = scalar_lea.sflag [#allocation3], %s268
        %s270 = sand.u32 %s181, 1
        %s271 = smul.addr %s270, 8
        %s272 = scalar_lea.vmem [#allocation2], %s271
        %s273 = smul.u32 64, %s21
        %p274 = scmp.lt.s32.totalorder %s273, 127
        %s275 = scalar_select %p274, %s273, 127
        %s276 = smul.addr %s275, 8
        %s277 = scalar_lea.vmem %s0, %s276
        %s278 = smul.u32 64, %s21
        %s279 = smul.u32 4, %s21
        %v280 = vld [vmem:[%s277] sm:$0xff]
        %v281 = vld [vmem:[%s277 + $0x8] sm:$0xff]
        %v282 = vld [vmem:[%s277 + $0x10] sm:$0xff]
        %v283 = vld [vmem:[%s277 + $0x18] sm:$0xff]
        %v284 = vld [vmem:[%s277 + $0x20] sm:$0xff]
        %v285 = vld [vmem:[%s277 + $0x28] sm:$0xff]
        %v286 = vld [vmem:[%s277 + $0x30] sm:$0xff]
        %v287 = vld [vmem:[%s277 + $0x38] sm:$0xff]
        %v288 = vld [vmem:[%s277 + $0x40] sm:$0xff]
        %v289 = vld [vmem:[%s277 + $0x48] sm:$0xff]
        %v290 = vld [vmem:[%s277 + $0x50] sm:$0xff]
        %v291 = vld [vmem:[%s277 + $0x58] sm:$0xff]
        %v292 = vld [vmem:[%s277 + $0x60] sm:$0xff]
        %v293 = vld [vmem:[%s277 + $0x68] sm:$0xff]
        %v294 = vld [vmem:[%s277 + $0x70] sm:$0xff]
        %v295 = vld [vmem:[%s277 + $0x78] sm:$0xff]
        %v296 = vld [vmem:[%s277 + $0x80] sm:$0xff]
        %v297 = vld [vmem:[%s277 + $0x88] sm:$0xff]
        %v298 = vld [vmem:[%s277 + $0x90] sm:$0xff]
        %v299 = vld [vmem:[%s277 + $0x98] sm:$0xff]
        %v300 = vld [vmem:[%s277 + $0xa0] sm:$0xff]
        %v301 = vld [vmem:[%s277 + $0xa8] sm:$0xff]
        %v302 = vld [vmem:[%s277 + $0xb0] sm:$0xff]
        %v303 = vld [vmem:[%s277 + $0xb8] sm:$0xff]
        %v304 = vld [vmem:[%s277 + $0xc0] sm:$0xff]
        %v305 = vld [vmem:[%s277 + $0xc8] sm:$0xff]
        %v306 = vld [vmem:[%s277 + $0xd0] sm:$0xff]
        %v307 = vld [vmem:[%s277 + $0xd8] sm:$0xff]
        %v308 = vld [vmem:[%s277 + $0xe0] sm:$0xff]
        %v309 = vld [vmem:[%s277 + $0xe8] sm:$0xff]
        %v310 = vld [vmem:[%s277 + $0xf0] sm:$0xff]
        %v311 = vld [vmem:[%s277 + $0xf8] sm:$0xff]
        %v312 = vld [vmem:[%s277 + $0x100] sm:$0xff]
        %v313 = vld [vmem:[%s277 + $0x108] sm:$0xff]
        %v314 = vld [vmem:[%s277 + $0x110] sm:$0xff]
        %v315 = vld [vmem:[%s277 + $0x118] sm:$0xff]
        %v316 = vld [vmem:[%s277 + $0x120] sm:$0xff]
        %v317 = vld [vmem:[%s277 + $0x128] sm:$0xff]
        %v318 = vld [vmem:[%s277 + $0x130] sm:$0xff]
        %v319 = vld [vmem:[%s277 + $0x138] sm:$0xff]
        %v320 = vld [vmem:[%s277 + $0x140] sm:$0xff]
        %v321 = vld [vmem:[%s277 + $0x148] sm:$0xff]
        %v322 = vld [vmem:[%s277 + $0x150] sm:$0xff]
        %v323 = vld [vmem:[%s277 + $0x158] sm:$0xff]
        %v324 = vld [vmem:[%s277 + $0x160] sm:$0xff]
        %v325 = vld [vmem:[%s277 + $0x168] sm:$0xff]
        %v326 = vld [vmem:[%s277 + $0x170] sm:$0xff]
        %v327 = vld [vmem:[%s277 + $0x178] sm:$0xff]
        %v328 = vld [vmem:[%s277 + $0x180] sm:$0xff]
        %v329 = vld [vmem:[%s277 + $0x188] sm:$0xff]
        %v330 = vld [vmem:[%s277 + $0x190] sm:$0xff]
        %v331 = vld [vmem:[%s277 + $0x198] sm:$0xff]
        %v332 = vld [vmem:[%s277 + $0x1a0] sm:$0xff]
        %v333 = vld [vmem:[%s277 + $0x1a8] sm:$0xff]
        %v334 = vld [vmem:[%s277 + $0x1b0] sm:$0xff]
        %v335 = vld [vmem:[%s277 + $0x1b8] sm:$0xff]
        %v336 = vld [vmem:[%s277 + $0x1c0] sm:$0xff]
        %v337 = vld [vmem:[%s277 + $0x1c8] sm:$0xff]
        %v338 = vld [vmem:[%s277 + $0x1d0] sm:$0xff]
        %v339 = vld [vmem:[%s277 + $0x1d8] sm:$0xff]
        %v340 = vld [vmem:[%s277 + $0x1e0] sm:$0xff]
        %v341 = vld [vmem:[%s277 + $0x1e8] sm:$0xff]
        %v342 = vld [vmem:[%s277 + $0x1f0] sm:$0xff]
        %v343 = vld [vmem:[%s277 + $0x1f8] sm:$0xff]
        %v344 = vld [vmem:[%s1] sm:$0xff]
        %v345 = vld [vmem:[%s1 + $0x8] sm:$0xff]
        %v346 = vld [vmem:[%s2] sm:$0xff]
        %v347 = vld [vmem:[%s2 + $0x8] sm:$0xff]
        %349 = vset.pattern.permute.xlu0 0
        %350 = vperm.xlu0 %349, %v346
        %v351 = vpop.permute.xlu0 %350
        %354 = vset.pattern.permute.xlu0 0
        %355 = vperm.xlu0 %354, %v347
        %v356 = vpop.permute.xlu0 %355
        %vm358 = vcmask 261120
        %v360 = vsel %vm358, %v344, 0
        %v363 = vsel %vm358, %v345, 0
        %v366 = vsel %vm358, %v280, 0
        %v369 = vsel %vm358, %v281, 0
        %v372 = vsel %vm358, %v282, 0
        %v375 = vsel %vm358, %v283, 0
        %v378 = vsel %vm358, %v284, 0
        %v381 = vsel %vm358, %v285, 0
        %v384 = vsel %vm358, %v286, 0
        %v387 = vsel %vm358, %v287, 0
        %v390 = vsel %vm358, %v288, 0
        %v393 = vsel %vm358, %v289, 0
        %v396 = vsel %vm358, %v290, 0
        %v399 = vsel %vm358, %v291, 0
        %v402 = vsel %vm358, %v292, 0
        %v405 = vsel %vm358, %v293, 0
        %v408 = vsel %vm358, %v294, 0
        %v411 = vsel %vm358, %v295, 0
        %v414 = vsel %vm358, %v296, 0
        %v417 = vsel %vm358, %v297, 0
        %v420 = vsel %vm358, %v298, 0
        %v423 = vsel %vm358, %v299, 0
        %v426 = vsel %vm358, %v300, 0
        %v429 = vsel %vm358, %v301, 0
        %v432 = vsel %vm358, %v302, 0
        %v435 = vsel %vm358, %v303, 0
        %v438 = vsel %vm358, %v304, 0
        %v441 = vsel %vm358, %v305, 0
        %v444 = vsel %vm358, %v306, 0
        %v447 = vsel %vm358, %v307, 0
        %v450 = vsel %vm358, %v308, 0
        %v453 = vsel %vm358, %v309, 0
        %v456 = vsel %vm358, %v310, 0
        %v459 = vsel %vm358, %v311, 0
        %v462 = vsel %vm358, %v312, 0
        %v465 = vsel %vm358, %v313, 0
        %v468 = vsel %vm358, %v314, 0
        %v471 = vsel %vm358, %v315, 0
        %v474 = vsel %vm358, %v316, 0
        %v477 = vsel %vm358, %v317, 0
        %v480 = vsel %vm358, %v318, 0
        %v483 = vsel %vm358, %v319, 0
        %v486 = vsel %vm358, %v320, 0
        %v489 = vsel %vm358, %v321, 0
        %v492 = vsel %vm358, %v322, 0
        %v495 = vsel %vm358, %v323, 0
        %v498 = vsel %vm358, %v324, 0
        %v501 = vsel %vm358, %v325, 0
        %v504 = vsel %vm358, %v326, 0
        %v507 = vsel %vm358, %v327, 0
        %v510 = vsel %vm358, %v328, 0
        %v513 = vsel %vm358, %v329, 0
        %v516 = vsel %vm358, %v330, 0
        %v519 = vsel %vm358, %v331, 0
        %v522 = vsel %vm358, %v332, 0
        %v525 = vsel %vm358, %v333, 0
        %v528 = vsel %vm358, %v334, 0
        %v531 = vsel %vm358, %v335, 0
        %v534 = vsel %vm358, %v336, 0
        %v537 = vsel %vm358, %v337, 0
        %v540 = vsel %vm358, %v338, 0
        %v543 = vsel %vm358, %v339, 0
        %v546 = vsel %vm358, %v340, 0
        %v549 = vsel %vm358, %v341, 0
        %v552 = vsel %vm358, %v342, 0
        %v555 = vsel %vm358, %v343, 0
        %557 = vmatpush.xpose.msra.mxu0 %v411
        %558 = vmatpush.xpose.msra.mxu0 %v408
        %559 = vmatpush.xpose.msra.mxu0 %v405
        %560 = vmatpush.xpose.msra.mxu0 %v402
        %561 = vmatpush.xpose.msra.mxu0 %v399
        %562 = vmatpush.xpose.msra.mxu0 %v396
        %563 = vmatpush.xpose.msra.mxu0 %v393
        %564 = vmatpush.xpose.msra.mxu0 %v390
        %565 = vmatpush.xpose.msra.mxu0 %v387
        %566 = vmatpush.xpose.msra.mxu0 %v384
        %567 = vmatpush.xpose.msra.mxu0 %v381
        %568 = vmatpush.xpose.msra.mxu0 %v378
        %569 = vmatpush.xpose.msra.mxu0 %v375
        %570 = vmatpush.xpose.msra.mxu0 %v372
        %571 = vmatpush.xpose.msra.mxu0 %v369
        %572 = vmatpush.xpose.msra.mxu0 %v366
        %573 = vmatmul.f32.gmra.mxu0 %v360
        %v574 = vpop.f32.mrf.mxu0
        %v575 = vadd.f32 %v351, %v574
        %576 = vmatmul.f32.gmra.mxu0 %v363
        %v577 = vpop.f32.mrf.mxu0
        %v578 = vadd.f32 %v356, %v577
        %579 = vdwg.mxu0
        %580 = vmatpush.xpose.msra.mxu0 %v459
        %581 = vmatpush.xpose.msra.mxu0 %v456
        %582 = vmatpush.xpose.msra.mxu0 %v453
        %583 = vmatpush.xpose.msra.mxu0 %v450
        %584 = vmatpush.xpose.msra.mxu0 %v447
        %585 = vmatpush.xpose.msra.mxu0 %v444
        %586 = vmatpush.xpose.msra.mxu0 %v441
        %587 = vmatpush.xpose.msra.mxu0 %v438
        %588 = vmatpush.xpose.msra.mxu0 %v435
        %589 = vmatpush.xpose.msra.mxu0 %v432
        %590 = vmatpush.xpose.msra.mxu0 %v429
        %591 = vmatpush.xpose.msra.mxu0 %v426
        %592 = vmatpush.xpose.msra.mxu0 %v423
        %593 = vmatpush.xpose.msra.mxu0 %v420
        %594 = vmatpush.xpose.msra.mxu0 %v417
        %595 = vmatpush.xpose.msra.mxu0 %v414
        %596 = vmatmul.f32.gmra.mxu0 %v360
        %v597 = vpop.f32.mrf.mxu0
        %v598 = vadd.f32 %v351, %v597
        %599 = vmatmul.f32.gmra.mxu0 %v363
        %v600 = vpop.f32.mrf.mxu0
        %v601 = vadd.f32 %v356, %v600
        %602 = vdwg.mxu0
        %603 = vmatpush.xpose.msra.mxu0 %v507
        %604 = vmatpush.xpose.msra.mxu0 %v504
        %605 = vmatpush.xpose.msra.mxu0 %v501
        %606 = vmatpush.xpose.msra.mxu0 %v498
        %607 = vmatpush.xpose.msra.mxu0 %v495
        %608 = vmatpush.xpose.msra.mxu0 %v492
        %609 = vmatpush.xpose.msra.mxu0 %v489
        %610 = vmatpush.xpose.msra.mxu0 %v486
        %611 = vmatpush.xpose.msra.mxu0 %v483
        %612 = vmatpush.xpose.msra.mxu0 %v480
        %613 = vmatpush.xpose.msra.mxu0 %v477
        %614 = vmatpush.xpose.msra.mxu0 %v474
        %615 = vmatpush.xpose.msra.mxu0 %v471
        %616 = vmatpush.xpose.msra.mxu0 %v468
        %617 = vmatpush.xpose.msra.mxu0 %v465
        %618 = vmatpush.xpose.msra.mxu0 %v462
        %619 = vmatmul.f32.gmra.mxu0 %v360
        %v620 = vpop.f32.mrf.mxu0
        %v621 = vadd.f32 %v351, %v620
        %622 = vmatmul.f32.gmra.mxu0 %v363
        %v623 = vpop.f32.mrf.mxu0
        %v624 = vadd.f32 %v356, %v623
        %625 = vdwg.mxu0
        %626 = vmatpush.xpose.msra.mxu0 %v555
        %627 = vmatpush.xpose.msra.mxu0 %v552
        %628 = vmatpush.xpose.msra.mxu0 %v549
        %629 = vmatpush.xpose.msra.mxu0 %v546
        %630 = vmatpush.xpose.msra.mxu0 %v543
        %631 = vmatpush.xpose.msra.mxu0 %v540
        %632 = vmatpush.xpose.msra.mxu0 %v537
        %633 = vmatpush.xpose.msra.mxu0 %v534
        %634 = vmatpush.xpose.msra.mxu0 %v531
        %635 = vmatpush.xpose.msra.mxu0 %v528
        %636 = vmatpush.xpose.msra.mxu0 %v525
        %637 = vmatpush.xpose.msra.mxu0 %v522
        %638 = vmatpush.xpose.msra.mxu0 %v519
        %639 = vmatpush.xpose.msra.mxu0 %v516
        %640 = vmatpush.xpose.msra.mxu0 %v513
        %641 = vmatpush.xpose.msra.mxu0 %v510
        %642 = vmatmul.f32.gmra.mxu0 %v360
        %v643 = vpop.f32.mrf.mxu0
        %v644 = vadd.f32 %v351, %v643
        %645 = vmatmul.f32.gmra.mxu0 %v363
        %v646 = vpop.f32.mrf.mxu0
        %v647 = vadd.f32 %v356, %v646
        %648 = vdwg.mxu0
        %v649 = vtanh.pop %v575
        %v650 = vtanh.pop %v598
        %v651 = vtanh.pop %v621
        %v652 = vtanh.pop %v644
        %v653 = vtanh.pop %v578
        %v654 = vtanh.pop %v601
        %v655 = vtanh.pop %v624
        %v656 = vtanh.pop %v647
        %v657 = vld [vmem:[%s3] sm:$0xff]
        %v658 = vld [vmem:[%s4] sm:$0xff]
        %660 = vset.pattern.permute.xlu0 0
        %661 = vperm.xlu0 %660, %v658
        %v662 = vpop.permute.xlu0 %661
        %vm664 = vcmask 130048
        %v666 = vsel %vm664, %v657, 0
        %668 = vmatpush.msra.mxu0 0.0
        %669 = vmatpush.msra.mxu0 0.0
        %670 = vmatpush.msra.mxu0 0.0
        %671 = vmatpush.msra.mxu0 0.0
        %672 = vmatpush.msra.mxu0 0.0
        %673 = vmatpush.msra.mxu0 0.0
        %674 = vmatpush.msra.mxu0 0.0
        %675 = vmatpush.msra.mxu0 0.0
        %676 = vmatpush.msra.mxu0 0.0
        %677 = vmatpush.msra.mxu0 0.0
        %678 = vmatpush.msra.mxu0 0.0
        %679 = vmatpush.msra.mxu0 0.0
        %680 = vmatpush.msra.mxu0 0.0
        %681 = vmatpush.msra.mxu0 0.0
        %682 = vmatpush.msra.mxu0 %v653
        %683 = vmatpush.msra.mxu0 %v649
        %684 = vmatmul.f32.gmra.mxu0 %v666
        %v685 = vpop.f32.mrf.mxu0
        %v686 = vadd.f32 %v662, %v685
        %687 = vdwg.mxu0
        %688 = vmatpush.msra.mxu0 0.0
        %689 = vmatpush.msra.mxu0 0.0
        %690 = vmatpush.msra.mxu0 0.0
        %691 = vmatpush.msra.mxu0 0.0
        %692 = vmatpush.msra.mxu0 0.0
        %693 = vmatpush.msra.mxu0 0.0
        %694 = vmatpush.msra.mxu0 0.0
        %695 = vmatpush.msra.mxu0 0.0
        %696 = vmatpush.msra.mxu0 0.0
        %697 = vmatpush.msra.mxu0 0.0
        %698 = vmatpush.msra.mxu0 0.0
        %699 = vmatpush.msra.mxu0 0.0
        %700 = vmatpush.msra.mxu0 0.0
        %701 = vmatpush.msra.mxu0 0.0
        %702 = vmatpush.msra.mxu0 %v654
        %703 = vmatpush.msra.mxu0 %v650
        %704 = vmatmul.f32.gmra.mxu0 %v666
        %v705 = vpop.f32.mrf.mxu0
        %v706 = vadd.f32 %v662, %v705
        %707 = vdwg.mxu0
        %708 = vmatpush.msra.mxu0 0.0
        %709 = vmatpush.msra.mxu0 0.0
        %710 = vmatpush.msra.mxu0 0.0
        %711 = vmatpush.msra.mxu0 0.0
        %712 = vmatpush.msra.mxu0 0.0
        %713 = vmatpush.msra.mxu0 0.0
        %714 = vmatpush.msra.mxu0 0.0
        %715 = vmatpush.msra.mxu0 0.0
        %716 = vmatpush.msra.mxu0 0.0
        %717 = vmatpush.msra.mxu0 0.0
        %718 = vmatpush.msra.mxu0 0.0
        %719 = vmatpush.msra.mxu0 0.0
        %720 = vmatpush.msra.mxu0 0.0
        %721 = vmatpush.msra.mxu0 0.0
        %722 = vmatpush.msra.mxu0 %v655
        %723 = vmatpush.msra.mxu0 %v651
        %724 = vmatmul.f32.gmra.mxu0 %v666
        %v725 = vpop.f32.mrf.mxu0
        %v726 = vadd.f32 %v662, %v725
        %727 = vdwg.mxu0
        %728 = vmatpush.msra.mxu0 0.0
        %729 = vmatpush.msra.mxu0 0.0
        %730 = vmatpush.msra.mxu0 0.0
        %731 = vmatpush.msra.mxu0 0.0
        %732 = vmatpush.msra.mxu0 0.0
        %733 = vmatpush.msra.mxu0 0.0
        %734 = vmatpush.msra.mxu0 0.0
        %735 = vmatpush.msra.mxu0 0.0
        %736 = vmatpush.msra.mxu0 0.0
        %737 = vmatpush.msra.mxu0 0.0
        %738 = vmatpush.msra.mxu0 0.0
        %739 = vmatpush.msra.mxu0 0.0
        %740 = vmatpush.msra.mxu0 0.0
        %741 = vmatpush.msra.mxu0 0.0
        %742 = vmatpush.msra.mxu0 %v656
        %743 = vmatpush.msra.mxu0 %v652
        %744 = vmatmul.f32.gmra.mxu0 %v666
        %v745 = vpop.f32.mrf.mxu0
        %v746 = vadd.f32 %v662, %v745
        %747 = vdwg.mxu0
        %v748 = vtanh.pop %v686
        %v749 = vtanh.pop %v706
        %v750 = vtanh.pop %v726
        %v751 = vtanh.pop %v746
        %v752 = vld [vmem:[%s5] sm:$0x3]
        %v753 = vld [vmem:[%s6] sm:$0x3]
        %755 = vset.pattern.permute.xlu0 0
        %756 = vperm.xlu0 %755, %v753
        %v757 = vpop.permute.xlu0 %756
        %vm759 = vcmask 64512
        %v761 = vsel %vm759, %v752, 0
        %763 = vmatpush.msra.mxu0 0.0
        %764 = vmatpush.msra.mxu0 0.0
        %765 = vmatpush.msra.mxu0 0.0
        %766 = vmatpush.msra.mxu0 0.0
        %767 = vmatpush.msra.mxu0 0.0
        %768 = vmatpush.msra.mxu0 0.0
        %769 = vmatpush.msra.mxu0 0.0
        %770 = vmatpush.msra.mxu0 0.0
        %771 = vmatpush.msra.mxu0 0.0
        %772 = vmatpush.msra.mxu0 0.0
        %773 = vmatpush.msra.mxu0 0.0
        %774 = vmatpush.msra.mxu0 0.0
        %775 = vmatpush.msra.mxu0 0.0
        %776 = vmatpush.msra.mxu0 0.0
        %777 = vmatpush.msra.mxu0 0.0
        %778 = vmatpush.msra.mxu0 %v748
        %779 = vmatmul.f32.gmra.mxu0 %v761
        %v780 = vpop.f32.mrf.mxu0
        %v781 = vadd.f32 %v757, %v780
        %782 = vdwg.mxu0
        %783 = vmatpush.msra.mxu0 0.0
        %784 = vmatpush.msra.mxu0 0.0
        %785 = vmatpush.msra.mxu0 0.0
        %786 = vmatpush.msra.mxu0 0.0
        %787 = vmatpush.msra.mxu0 0.0
        %788 = vmatpush.msra.mxu0 0.0
        %789 = vmatpush.msra.mxu0 0.0
        %790 = vmatpush.msra.mxu0 0.0
        %791 = vmatpush.msra.mxu0 0.0
        %792 = vmatpush.msra.mxu0 0.0
        %793 = vmatpush.msra.mxu0 0.0
        %794 = vmatpush.msra.mxu0 0.0
        %795 = vmatpush.msra.mxu0 0.0
        %796 = vmatpush.msra.mxu0 0.0
        %797 = vmatpush.msra.mxu0 0.0
        %798 = vmatpush.msra.mxu0 %v749
        %799 = vmatmul.f32.gmra.mxu0 %v761
        %v800 = vpop.f32.mrf.mxu0
        %v801 = vadd.f32 %v757, %v800
        %802 = vdwg.mxu0
        %803 = vmatpush.msra.mxu0 0.0
        %804 = vmatpush.msra.mxu0 0.0
        %805 = vmatpush.msra.mxu0 0.0
        %806 = vmatpush.msra.mxu0 0.0
        %807 = vmatpush.msra.mxu0 0.0
        %808 = vmatpush.msra.mxu0 0.0
        %809 = vmatpush.msra.mxu0 0.0
        %810 = vmatpush.msra.mxu0 0.0
        %811 = vmatpush.msra.mxu0 0.0
        %812 = vmatpush.msra.mxu0 0.0
        %813 = vmatpush.msra.mxu0 0.0
        %814 = vmatpush.msra.mxu0 0.0
        %815 = vmatpush.msra.mxu0 0.0
        %816 = vmatpush.msra.mxu0 0.0
        %817 = vmatpush.msra.mxu0 0.0
        %818 = vmatpush.msra.mxu0 %v750
        %819 = vmatmul.f32.gmra.mxu0 %v761
        %v820 = vpop.f32.mrf.mxu0
        %v821 = vadd.f32 %v757, %v820
        %822 = vdwg.mxu0
        %823 = vmatpush.msra.mxu0 0.0
        %824 = vmatpush.msra.mxu0 0.0
        %825 = vmatpush.msra.mxu0 0.0
        %826 = vmatpush.msra.mxu0 0.0
        %827 = vmatpush.msra.mxu0 0.0
        %828 = vmatpush.msra.mxu0 0.0
        %829 = vmatpush.msra.mxu0 0.0
        %830 = vmatpush.msra.mxu0 0.0
        %831 = vmatpush.msra.mxu0 0.0
        %832 = vmatpush.msra.mxu0 0.0
        %833 = vmatpush.msra.mxu0 0.0
        %834 = vmatpush.msra.mxu0 0.0
        %835 = vmatpush.msra.mxu0 0.0
        %836 = vmatpush.msra.mxu0 0.0
        %837 = vmatpush.msra.mxu0 0.0
        %838 = vmatpush.msra.mxu0 %v751
        %839 = vmatmul.f32.gmra.mxu0 %v761
        %v840 = vpop.f32.mrf.mxu0
        %v841 = vadd.f32 %v757, %v840
        %842 = vdwg.mxu0
        %v843 = vtanh.pop %v781
        %v844 = vtanh.pop %v801
        %v845 = vtanh.pop %v821
        %v846 = vtanh.pop %v841
        %v851 = vrot.slane %v844, 6
        %v852 = vrot.slane %v845, 4
        %v853 = vrot.slane %v846, 2
        %vm854 = vcmask 1041408
        %v855 = vsel %vm854, %v843, %v851
        %vm856 = vcmask 1045508
        %v857 = vsel %vm856, %v852, %v853
        %vm858 = vcmask 1043456
        %v859 = vsel %vm858, %v855, %v857
        %861 = vst [vmem:[%s272] sm:$0xff] %v859
        %s862 = sand.u32 %s181, 1
        %s863 = scalar_lea.sflag [#allocation3], %s862
        %s864 = sand.u32 %s181, 1
        %s865 = smul.addr %s864, 8
        %s866 = scalar_lea.vmem [#allocation2], %s865
        // Predicated region
        $region49: #{mlp_forward.1} parent=47 // pred_check
          %p867 = pneg %p191
        $region50: #{mlp_forward.1} parent=47 // pred_check_branch
          %869 = sbr.rel (%p867) target = $region52
        $region51: #{mlp_forward.1} parent=47 // pred_region
          %s870 = smul.u32 4, %s21
          %872 = vsyncadd %s863, 0
          %s873 = smul.addr %s870, 2
          %s874 = scalar_lea.hbm %s7, %s873
          %s876 = sshll.u32 %s866, 4
          %s877 = int_to_ptr.vmem [resolvable:$true] %s876
          %s878 = sshll.u32 %s874, 4
          %s879 = int_to_ptr.hbm [resolvable:$true] %s878
          %881 = dma.vmem_to_hbm [thread:$0]  %s877, 128, %s879, %s863
        $region52: #{mlp_forward.1} parent=47 // pred_fallthru
          _
      $region48: #{mlp_forward.1} parent=5 // pred_fallthru
        _
      %p882 = scmp.le.s32.totalorder 2, %s16
      // Predicated region
      $region53: #{mlp_forward.1} parent=5 // pred_check
        %p883 = pneg %p882
      $region54: #{mlp_forward.1} parent=5 // pred_check_branch
        %885 = sbr.rel (%p883) target = $region56
      $region55: #{mlp_forward.1} parent=5 // pred_region
        %s886 = ssub.s32 %s16, 2
        // Predicated region
        $region57: #{mlp_forward.1} parent=55 // pred_check
          %p887 = pneg %p197
        $region58: #{mlp_forward.1} parent=55 // pred_check_branch
          %889 = sbr.rel (%p887) target = $region60
        $region59: #{mlp_forward.1} parent=55 // pred_region
          %s890 = sand.u32 %s182, 1
          %s891 = scalar_lea.sflag [#allocation3], %s890
          %s892 = sand.u32 %s182, 1
          %s893 = smul.addr %s892, 8
          %s894 = scalar_lea.vmem [#allocation2], %s893
          %896 = dma.done %s891, 128
        $region60: #{mlp_forward.1} parent=55 // pred_fallthru
          _
      $region56: #{mlp_forward.1} parent=5 // pred_fallthru
        _
    $region6: #{mlp_forward.1} parent=1 // loop_footer
      %s20 = sadd.s32 1, %s16
    $region7: #{mlp_forward.1} parent=1 // loop_footer_branch
      %15 = sbr.rel target = $region3
    $region8: #{mlp_forward.1} parent=1 // loop_exit
      _
    %897 = vsyncpa [#allocation3], 1
    %s898 = scalar_lea.sflag [#allocation3], 1
    %899 = vsyncpa %s898, 1

</llo_original>
